<compile_context>
chip_gen: v5e
topology: v5e:2x2
jax: 0.10.0
libtpu: 0.0.40
codegen_flags: <defaults>
</compile_context>

<pallas_src>
import math
import numpy as np
import jax
import jax.numpy as jnp
from jax.experimental import pallas as pl
from jax.experimental.pallas import tpu as pltpu

_Q = 128          # logical rows packed per output lane-row (lane-dense output)
_K_CHUNK = 512    # in-kernel K chunk; bounds live temporaries to ~tile*4KB


def _round_up(x, m):
    return ((x + m - 1) // m) * m


def _tpu_generation():
    try:
        kind = jax.devices()[0].device_kind.lower()
    except Exception:
        return 6
    if "v5" in kind:
        return 5
    if "v6" in kind:
        return 6
    if "7" in kind:
        return 7
    return 6


def _budget_bytes():
    """(per-x-block DMA target, scoped-VMEM window we must stay inside)."""
    gen = _tpu_generation()
    if gen == 5:
        # ~0.82 TB/s HBM, 16 MiB default scoped VMEM window.
        return 3 << 20, 13 << 20
    # v6e (~1.4 TB/s) / v7x (~3.2 TB/s, 64 MiB VMEM): 32 MiB default window.
    return 6 << 20, 26 << 20


def _pick_rows_tile(rows, in_row_bytes, out_row_bytes, resident_bytes, itemsize):
    """Largest row tile that (a) puts the x block near the per-generation DMA
    target, (b) fits the default scoped-VMEM window counting triple-buffered
    inputs, double-buffered outputs and resident weights (lane-padded sizes),
    (c) is a multiple of the dtype-native sublane packing (8 f32 / 16 bf16 /
    32 int8), and (d) leaves >= 2 grid blocks for v7x's two TensorCores."""
    sub = max(8, 32 // max(1, itemsize))
    if rows <= sub:
        return rows
    target, window = _budget_bytes()
    per_row = 3 * in_row_bytes + 2 * out_row_bytes
    t = min(target // max(1, in_row_bytes),
            max(sub, (window - resident_bytes) // max(1, per_row)))
    t = min(t, pl.cdiv(rows, 2), rows)     # >= 2 grid blocks when possible
    return max(sub, (t // sub) * sub)


# ---------------------------------------------------------------------------
# Packed path (D <= 128 and 128 % D == 0): lane-dense input AND output.
#   x viewed as (G, L) with L = 128*D (128 logical rows per packed row)
#   out (G, 128):  out[g, q] = sum_d x[g*128 + q, d] * w[d] + bias
# ---------------------------------------------------------------------------
def _packed_kernel(x_ref, w_ref, s_ref, b_ref, o_ref):
    # x_ref: (tile, L) VMEM   w_ref: (1, L) f32 VMEM (w tiled 128x)
    # s_ref: (L, 128) bf16 VMEM, S[q*D + d, q] = 1   b_ref: (1,) f32 SMEM
    # o_ref: (tile, 128) VMEM (lane-dense scores)
    tile, L = x_ref.shape
    ck = min(L, _K_CHUNK)
    acc = jnp.zeros((tile, _Q), dtype=jnp.float32)
    for c in range(L // ck):                      # static unroll, free ref slices
        c0, c1 = c * ck, (c + 1) * ck
        # Exact f32 products on the VPU (matches torch's f32 addmv products).
        xw = x_ref[:, c0:c1].astype(jnp.float32) * w_ref[:, c0:c1]
        # 2-pass bf16 split-accumulate: near-f32 accuracy at a fixed, minimal
        # MXU push count (no f32 precision-emulation multipass).
        xw_hi = xw.astype(jnp.bfloat16)
        xw_lo = (xw - xw_hi.astype(jnp.float32)).astype(jnp.bfloat16)
        s_blk = s_ref[c0:c1, :]
        acc += jnp.dot(xw_hi, s_blk, preferred_element_type=jnp.float32)
        acc += jnp.dot(xw_lo, s_blk, preferred_element_type=jnp.float32)
    o_ref[...] = (acc + b_ref[0]).astype(o_ref.dtype)


def _scorer_packed(xq, w, bias, out_dtype):
    G, L = xq.shape
    D = w.shape[0]

    # 0/1 segment-sum matrix (exactly representable in bf16): S[q*D + d, q] = 1.
    S = (jnp.arange(L, dtype=jnp.int32)[:, None] // D
         == jnp.arange(_Q, dtype=jnp.int32)[None, :]).astype(jnp.bfloat16)
    w_tiled = jnp.tile(w.astype(jnp.float32), _Q).reshape(1, L)

    itemsize = jnp.dtype(xq.dtype).itemsize
    in_row = L * itemsize
    out_row = _Q * jnp.dtype(out_dtype).itemsize
    resident = 2 * (L * _Q * 2 + L * 4)                 # S + w_tiled buffers
    tile = _pick_rows_tile(G, in_row, out_row, resident, itemsize)
    grid_n = pl.cdiv(G, tile)

    # Deeper input buffering only pays off on long grids.
    if grid_n >= 4:
        x_spec = pl.BlockSpec((tile, L), lambda i: (i, 0),
                              pipeline_mode=pl.Buffered(3))
    else:
        x_spec = pl.BlockSpec((tile, L), lambda i: (i, 0))

    out = pl.pallas_call(
        _packed_kernel,
        out_shape=jax.ShapeDtypeStruct((G, _Q), out_dtype),
        grid_spec=pltpu.PrefetchScalarGridSpec(
            num_scalar_prefetch=0,
            grid=(grid_n,),
            in_specs=[
                x_spec,                                                # packed rows
                pl.BlockSpec((1, L), lambda i: (0, 0)),                # tiled w (f32)
                pl.BlockSpec((L, _Q), lambda i: (0, 0)),               # segment-sum S
                pl.BlockSpec(memory_space=pltpu.MemorySpace.SMEM),     # bias (1,)
            ],
            out_specs=pl.BlockSpec((tile, _Q), lambda i: (i, 0)),
        ),
        compiler_params=pltpu.CompilerParams(
            dimension_semantics=("parallel",)),
    )(xq, w_tiled, S, bias)
    # Row-major (G, 128) == logical row order.
    return out.reshape(-1)


# ---------------------------------------------------------------------------
# General fallback (D does not divide 128) / <128-row tails: (tile, D) blocks,
# f32 VPU multiply + lane reduction.
# TODO(synk): if real workloads hit this path with D < 128, restructure it
# like the packed path (lane-dense in/out) instead of a (tile, 1) output.
# ---------------------------------------------------------------------------
def _rows_kernel(x_ref, w_ref, b_ref, o_ref):
    prod = x_ref[...].astype(jnp.float32) * w_ref[...]      # exact f32 products
    s = jnp.sum(prod, axis=-1, keepdims=True)
    o_ref[...] = (s + b_ref[0]).astype(o_ref.dtype)


def _scorer_rows(xf, w, bias, out_dtype):
    N, D = xf.shape
    itemsize = jnp.dtype(xf.dtype).itemsize
    in_row = _round_up(D, 128) * itemsize                   # lane-padded VMEM row
    out_row = 128 * jnp.dtype(out_dtype).itemsize           # (tile,1) pads to 128 lanes
    resident = 2 * _round_up(D, 128) * 4                    # weight buffers
    tile = _pick_rows_tile(N, in_row, out_row, resident, itemsize)
    grid_n = pl.cdiv(N, tile)

    if grid_n >= 4:
        x_spec = pl.BlockSpec((tile, D), lambda i: (i, 0),
                              pipeline_mode=pl.Buffered(3))
    else:
        x_spec = pl.BlockSpec((tile, D), lambda i: (i, 0))

    out = pl.pallas_call(
        _rows_kernel,
        out_shape=jax.ShapeDtypeStruct((N, 1), out_dtype),
        grid_spec=pltpu.PrefetchScalarGridSpec(
            num_scalar_prefetch=0,
            grid=(grid_n,),
            in_specs=[
                x_spec,                                                # x row tile
                pl.BlockSpec((1, D), lambda i: (0, 0)),                # weight vector
                pl.BlockSpec(memory_space=pltpu.MemorySpace.SMEM),     # bias (1,)
            ],
            out_specs=pl.BlockSpec((tile, 1), lambda i: (i, 0)),
        ),
        compiler_params=pltpu.CompilerParams(
            dimension_semantics=("parallel",)),
    )(xf, w.astype(jnp.float32).reshape(1, D), bias)
    return out.reshape(-1)


def scorer_forward(x, w, bias=None):
    """x: (..., D); w: (D,); bias: (1,) or None.  Returns (..., 1)."""
    orig_shape = x.shape
    D = orig_shape[-1]
    N = int(np.prod(orig_shape[:-1], dtype=np.int64)) if len(orig_shape) > 1 else 1
    out_dtype = x.dtype

    if bias is None:
        bias_arr = jnp.zeros((1,), dtype=jnp.float32)     # same result as torch's mv
    else:
        bias_arr = jnp.asarray(bias).reshape((1,)).astype(jnp.float32)

    xf = x.reshape(N, D)

    use_packed = (D <= 128) and (128 % D == 0)
    n_main = (N // _Q) * _Q if use_packed else 0

    parts = []
    if n_main > 0:
        # Free metadata reshape when N % 128 == 0; otherwise the prefix slice
        # costs one extra copy of the main rows.
        # TODO(synk): a 1-D-input packed kernel (in-kernel (tile*L,)->(tile,L)
        # regroup) would avoid that copy for large ragged N.
        x_main = xf if n_main == N else xf[:n_main]
        parts.append(_scorer_packed(x_main.reshape(n_main // _Q, _Q * D),
                                    w, bias_arr, out_dtype))
    if n_main < N:
        parts.append(_scorer_rows(xf[n_main:], w, bias_arr, out_dtype))

    scores = parts[0] if len(parts) == 1 else jnp.concatenate(parts)
    return scores.reshape(orig_shape[:-1] + (1,))


if __name__ == "__main__":
    # Deterministic parameter init mirroring Scorer.__init__ (isize = hidden).
    isize = 32
    key = jax.random.PRNGKey(0)
    kw, k1, k2, k3 = jax.random.split(key, 4)

    bound = math.sqrt(1.0 / isize)
    w = jax.random.uniform(kw, (isize,), dtype=jnp.float32,
                           minval=-bound, maxval=bound)
    bias = jnp.zeros((1,), dtype=jnp.float32)             # torch.zeros(1)

    def ref_fn(x):
        return (x.reshape(-1, isize) @ w + bias[0]).reshape(x.shape[:-1] + (1,))

    cases = {
        "small (rows fallback)":  jax.random.normal(k1, (2, 8, isize), jnp.float32),
        "packed (N % 128 == 0)":  jax.random.normal(k2, (4, 64, isize), jnp.float32),
        "ragged (packed + tail)": jax.random.normal(k3, (3, 50, isize), jnp.float32),
    }
    for name, x in cases.items():
        out = jax.block_until_ready(scorer_forward(x, w, bias))
        assert out.shape == x.shape[:-1] + (1,), name
        np.testing.assert_allclose(np.asarray(out), np.asarray(ref_fn(x)),
                                   rtol=1e-4, atol=5e-5, err_msg=name)

    print("KERNEL_OK")
</pallas_src>

<mosaic_0001>
module attributes {stable_mosaic.version = 11 : i64} {
  func.func @_rows_kernel(%arg0: i32, %arg1: memref<8x32xf32, #tpu.memory_space<vmem>>, %arg2: memref<1x32xf32, #tpu.memory_space<vmem>>, %arg3: memref<1xf32, #tpu.memory_space<smem>>, %arg4: memref<8x1xf32, #tpu.memory_space<vmem>>) attributes {dimension_semantics = [#tpu.dimension_semantics<parallel>], iteration_bounds = array<i64: 2>, scalar_prefetch = 0 : i64, scratch_operands = 0 : i64, tpu.core_type = #tpu.core_type<tc>, window_params = [{transform_indices = @transform_0, window_bounds = array<i64: 8, 32>}, {pipeline_mode = #tpu.pipeline_mode<synchronous>, transform_indices = @transform_1, window_bounds = array<i64: 1, 32>}, {transform_indices = @transform_2, window_bounds = array<i64: 1>}, {transform_indices = @transform_3, window_bounds = array<i64: 8, 1>}]} {
    %c0 = arith.constant 0 : index
    %c0_0 = arith.constant 0 : index
    %0 = vector.load %arg1[%c0, %c0_0] : memref<8x32xf32, #tpu.memory_space<vmem>>, vector<8x32xf32>
    %c0_1 = arith.constant 0 : index
    %c0_2 = arith.constant 0 : index
    %1 = vector.load %arg2[%c0_1, %c0_2] : memref<1x32xf32, #tpu.memory_space<vmem>>, vector<1x32xf32>
    %2 = vector.broadcast %1 : vector<1x32xf32> to vector<8x32xf32>
    %3 = arith.mulf %0, %2 : vector<8x32xf32>
    %cst = arith.constant dense<0.000000e+00> : vector<8xf32>
    %4 = vector.multi_reduction <add>, %3, %cst [1] : vector<8x32xf32> to vector<8xf32>
    %5 = vector.shape_cast %4 : vector<8xf32> to vector<8x1xf32>
    %c0_3 = arith.constant 0 : index
    %6 = memref.load %arg3[%c0_3] : memref<1xf32, #tpu.memory_space<smem>>
    %7 = vector.broadcast %6 : f32 to vector<8x1xf32>
    %8 = arith.addf %5, %7 : vector<8x1xf32>
    %c0_4 = arith.constant 0 : index
    %c0_5 = arith.constant 0 : index
    %9 = vector.load %arg4[%c0_4, %c0_5] : memref<8x1xf32, #tpu.memory_space<vmem>>, vector<8x1xf32>
    tpu.vector_store %arg4[%c0_4, %c0_5], %8 {strides = array<i32>} : memref<8x1xf32, #tpu.memory_space<vmem>>, vector<8x1xf32>,
    return
  }
  func.func @transform_0(%arg0: i32) -> (i32, i32) {
    %c0_i32 = arith.constant 0 : i32
    %c0_i32_0 = arith.constant 0 : i32
    return %arg0, %c0_i32 : i32, i32
  }
  func.func @transform_1(%arg0: i32) -> (i32, i32) {
    %c0_i32 = arith.constant 0 : i32
    %c0_i32_0 = arith.constant 0 : i32
    %c0_i32_1 = arith.constant 0 : i32
    return %c0_i32, %c0_i32_0 : i32, i32
  }
  func.func @transform_2(%arg0: i32) -> i32 {
    %c0_i32 = arith.constant 0 : i32
    %c0_i32_0 = arith.constant 0 : i32
    return %c0_i32 : i32
  }
  func.func @transform_3(%arg0: i32) -> (i32, i32) {
    %c0_i32 = arith.constant 0 : i32
    %c0_i32_0 = arith.constant 0 : i32
    return %arg0, %c0_i32 : i32, i32
  }
}

</mosaic_0001>

<llo_original>
// kernel: tpu_custom_call.1
$region0: #{tpu_custom_call.1}
  #allocation0 [shape = 'u32[]', space=smem, size = 0x4, offset = 0x4, fixed_abs, tag = 'smem constant byte address 0x4 - core index']
  #allocation1 [shape = 'u32[72,128]{1,0:T(1,128)}', space=vmem, size = 0x9000, scoped, tag = 'internal scratch']
  #allocation2 [shape = 'f32[1]{0:T(128)S(6)}', space=smem, size = 0x200, scoped, tag = 'scoped memory for tpu_custom_call.1']
  %s0 = inlined_call_operand.hbm [shape: f32[16,32], index: 0, kind: input, shape index: {}]
  %s1 = inlined_call_operand.vmem [shape: f32[1,32], index: 1, kind: input, shape index: {}]
  %s2 = inlined_call_operand.<no memory space> [shape: f32[1], index: 2, kind: input, shape index: {}]
  %s3 = inlined_call_operand.vmem [shape: f32[16,1], index: 3, kind: output, shape index: {}]
  %s4 = sld [smem:[#allocation0]]
  $region49: #{tpu_custom_call.1} parent=0
    _
  %s6 = ssub.s32 1, %s4
  %s7 = scalar_select 0, %s6, %s4
  %8 = sst [smem:[#allocation2]] %s2
  $region1: #{tpu_custom_call.1} parent=0
    #allocation3 [shape = 'u8[8192]{0}', space=vmem, size = 0x2000, scoped, tag = 'input window, operand 0']
    #allocation4 [shape = 's32[2]{0}', space=sflag, size = 0x8, scoped, tag = 'scoped memory for tpu_custom_call.1']
    %9 = vsyncpa [#allocation4], 0
    %s10 = scalar_lea.sflag [#allocation4], 1
    %11 = vsyncpa %s10, 0
    loop: start=0, step=1, limit=4
    $region2: #{tpu_custom_call.1} parent=1 // loop_pre_header
      _
    $region3: #{tpu_custom_call.1} parent=1 // loop_header
      %s13 = sphi 0, %s17
      %p14 = scmp.ge.s32.totalorder %s13, 4
      %s23 = sphi 0, %s25
      %s26 = sphi 0, %s23
      %s27 = sphi 0, %s26
      %s43 = sphi 0, %s27
      %s47 = sphi 0, %s47
      %s49 = sphi 0, %s47
      %s50 = sphi 0, %s49
      %s64 = sphi 0, %s50
      %s68 = sphi 0, %s68
      %s70 = sphi 0, %s68
      %s71 = sphi 0, %s70
      %s85 = sphi 0, %s71
      %s91 = sphi 0, %s93
      %s94 = sphi 0, %s91
      %s95 = sphi 0, %s94
      %s111 = sphi 0, %s95
    $region4: #{tpu_custom_call.1} parent=1 // loop_header_branch
      %16 = sbr.rel (%p14) target = $region8
    $region5: #{tpu_custom_call.1} parent=1 // loop_body
      %s18 = ssub.s32 %s13, 1
      %s19 = ssub.s32 %s13, 2
      %s20 = sadd.s32 %s13, 1
      %s21 = ssub.s32 %s13, %s20
      %p22 = scmp.eq.s32.totalorder %s21, 0
      %s24 = sadd.s32 %s23, 1
      %s25 = scalar_select %p22, %s23, %s24
      %p28 = pneg %p22
      %p29 = scmp.eq.s32.totalorder %s13, 1
      %p30 = por %p28, %p29
      %p31 = scmp.ne.s32.totalorder %s23, %s26
      %p32 = scmp.eq.s32.totalorder %s13, 0
      %p33 = por %p31, %p32
      %p34 = scmp.ne.s32.totalorder %s23, %s26
      %p35 = scmp.eq.s32.totalorder %s18, 1
      %p36 = por %p34, %p35
      %p37 = scmp.ne.s32.totalorder %s26, %s27
      %p38 = scmp.eq.s32.totalorder %s18, 0
      %p39 = por %p37, %p38
      %p40 = scmp.ne.s32.totalorder %s26, %s27
      %p41 = scmp.eq.s32.totalorder %s19, 1
      %p42 = por %p40, %p41
      %p44 = scmp.ne.s32.totalorder %s27, %s43
      %p45 = scmp.eq.s32.totalorder %s19, 0
      %p46 = por %p44, %p45
      %s48 = sadd.s32 %s47, 1
      %p51 = scmp.eq.s32.totalorder %s13, 1
      %p52 = scmp.ne.s32.totalorder %s47, %s49
      %p53 = scmp.eq.s32.totalorder %s13, 0
      %p54 = por %p52, %p53
      %p55 = scmp.ne.s32.totalorder %s47, %s49
      %p56 = scmp.eq.s32.totalorder %s18, 1
      %p57 = por %p55, %p56
      %p58 = scmp.ne.s32.totalorder %s49, %s50
      %p59 = scmp.eq.s32.totalorder %s18, 0
      %p60 = por %p58, %p59
      %p61 = scmp.ne.s32.totalorder %s49, %s50
      %p62 = scmp.eq.s32.totalorder %s19, 1
      %p63 = por %p61, %p62
      %p65 = scmp.ne.s32.totalorder %s50, %s64
      %p66 = scmp.eq.s32.totalorder %s19, 0
      %p67 = por %p65, %p66
      %s69 = sadd.s32 %s68, 1
      %p72 = scmp.eq.s32.totalorder %s13, 1
      %p73 = scmp.ne.s32.totalorder %s68, %s70
      %p74 = scmp.eq.s32.totalorder %s13, 0
      %p75 = por %p73, %p74
      %p76 = scmp.ne.s32.totalorder %s68, %s70
      %p77 = scmp.eq.s32.totalorder %s18, 1
      %p78 = por %p76, %p77
      %p79 = scmp.ne.s32.totalorder %s70, %s71
      %p80 = scmp.eq.s32.totalorder %s18, 0
      %p81 = por %p79, %p80
      %p82 = scmp.ne.s32.totalorder %s70, %s71
      %p83 = scmp.eq.s32.totalorder %s19, 1
      %p84 = por %p82, %p83
      %p86 = scmp.ne.s32.totalorder %s71, %s85
      %p87 = scmp.eq.s32.totalorder %s19, 0
      %p88 = por %p86, %p87
      %s89 = ssub.s32 %s13, %s20
      %p90 = scmp.eq.s32.totalorder %s89, 0
      %s92 = sadd.s32 %s91, 1
      %s93 = scalar_select %p90, %s91, %s92
      %p96 = pneg %p90
      %p97 = scmp.eq.s32.totalorder %s13, 1
      %p98 = por %p96, %p97
      %p99 = scmp.ne.s32.totalorder %s91, %s94
      %p100 = scmp.eq.s32.totalorder %s13, 0
      %p101 = por %p99, %p100
      %p102 = scmp.ne.s32.totalorder %s91, %s94
      %p103 = scmp.eq.s32.totalorder %s18, 1
      %p104 = por %p102, %p103
      %p105 = scmp.ne.s32.totalorder %s94, %s95
      %p106 = scmp.eq.s32.totalorder %s18, 0
      %p107 = por %p105, %p106
      %p108 = scmp.ne.s32.totalorder %s94, %s95
      %p109 = scmp.eq.s32.totalorder %s19, 1
      %p110 = por %p108, %p109
      %p112 = scmp.ne.s32.totalorder %s95, %s111
      %p113 = scmp.eq.s32.totalorder %s19, 0
      %p114 = por %p112, %p113
      %p115 = scmp.le.s32.totalorder 1, %s13
      %p116 = scmp.lt.s32.totalorder %s13, 3
      %p117 = pnand %p115, %p116
      %p118 = pneg %p117
      // Predicated region
      $region9: #{tpu_custom_call.1} parent=5 // pred_check
        _
      $region10: #{tpu_custom_call.1} parent=5 // pred_check_branch
        %120 = sbr.rel (%p117) target = $region12
      $region11: #{tpu_custom_call.1} parent=5 // pred_region
        %s121 = ssub.s32 %s13, 1
        // Predicated region
        $region13: #{tpu_custom_call.1} parent=11 // pred_check
          %p122 = pneg %p60
        $region14: #{tpu_custom_call.1} parent=11 // pred_check_branch
          %124 = sbr.rel (%p122) target = $region16
        $region15: #{tpu_custom_call.1} parent=11 // pred_region
          _
        $region16: #{tpu_custom_call.1} parent=11 // pred_fallthru
          _
        // Predicated region
        $region17: #{tpu_custom_call.1} parent=11 // pred_check
          %p125 = pneg %p81
        $region18: #{tpu_custom_call.1} parent=11 // pred_check_branch
          %127 = sbr.rel (%p125) target = $region20
        $region19: #{tpu_custom_call.1} parent=11 // pred_region
          _
        $region20: #{tpu_custom_call.1} parent=11 // pred_fallthru
          _
      $region12: #{tpu_custom_call.1} parent=5 // pred_fallthru
        _
      %p128 = scmp.lt.s32.totalorder %s13, 2
      // Predicated region
      $region21: #{tpu_custom_call.1} parent=5 // pred_check
        %p129 = pneg %p128
      $region22: #{tpu_custom_call.1} parent=5 // pred_check_branch
        %131 = sbr.rel (%p129) target = $region24
      $region23: #{tpu_custom_call.1} parent=5 // pred_region
        // Predicated region
        $region25: #{tpu_custom_call.1} parent=23 // pred_check
          %p132 = pneg %p33
        $region26: #{tpu_custom_call.1} parent=23 // pred_check_branch
          %134 = sbr.rel (%p132) target = $region28
        $region27: #{tpu_custom_call.1} parent=23 // pred_region
          %s135 = sand.u32 %s23, 1
          %s136 = scalar_lea.sflag [#allocation4], %s135
          %s137 = sand.u32 %s23, 1
          %s138 = smul.addr %s137, 8
          %s139 = scalar_lea.vmem [#allocation3], %s138
          %141 = vsyncadd %s136, 0
          %s142 = smul.addr %s13, 8
          %s143 = scalar_lea.hbm %s0, %s142
          %s145 = sshll.u32 %s143, 4
          %s146 = int_to_ptr.hbm [resolvable:$true] %s145
          %s147 = sshll.u32 %s139, 4
          %s148 = int_to_ptr.vmem [resolvable:$true] %s147
          %150 = dma.hbm_to_vmem [thread:$0]  %s146, 128, %s148, %s136
        $region28: #{tpu_custom_call.1} parent=23 // pred_fallthru
          _
      $region24: #{tpu_custom_call.1} parent=5 // pred_fallthru
        _
      %p151 = scmp.le.s32.totalorder 1, %s13
      %p152 = scmp.lt.s32.totalorder %s13, 3
      %p153 = pnand %p151, %p152
      %p154 = pneg %p153
      // Predicated region
      $region29: #{tpu_custom_call.1} parent=5 // pred_check
        _
      $region30: #{tpu_custom_call.1} parent=5 // pred_check_branch
        %156 = sbr.rel (%p153) target = $region32
      $region31: #{tpu_custom_call.1} parent=5 // pred_region
        %s157 = ssub.s32 %s13, 1
        %s158 = sand.u32 %s26, 1
        %s159 = scalar_lea.sflag [#allocation4], %s158
        %s160 = sand.u32 %s26, 1
        %s161 = smul.addr %s160, 8
        %s162 = scalar_lea.vmem [#allocation3], %s161
        // Predicated region
        $region33: #{tpu_custom_call.1} parent=31 // pred_check
          %p163 = pneg %p39
        $region34: #{tpu_custom_call.1} parent=31 // pred_check_branch
          %165 = sbr.rel (%p163) target = $region36
        $region35: #{tpu_custom_call.1} parent=31 // pred_region
          %167 = dma.done %s159, 128
        $region36: #{tpu_custom_call.1} parent=31 // pred_fallthru
          _
        %s168 = sand.u32 %s26, 1
        %s169 = scalar_lea.sflag [#allocation4], %s168
        %s170 = sand.u32 %s26, 1
        %s171 = smul.addr %s170, 8
        %s172 = scalar_lea.vmem [#allocation3], %s171
        %p173 = pneg %p39
        %p174 = pneg %p36
        %p175 = pneg %p60
        %p176 = pneg %p57
        %p177 = pneg %p81
        %p178 = pneg %p78
        %p179 = pneg %p107
        %p180 = pneg %p104
        %p181 = scmp.lt.s32.totalorder %s18, 1
        %s182 = scalar_select %p181, %s18, 1
        %s183 = smul.addr %s182, 8
        %s184 = scalar_lea.vmem %s3, %s183
        %p185 = scmp.lt.s32.totalorder %s18, 1
        %s186 = scalar_select %p185, %s18, 1
        %s187 = smul.addr %s186, 8
        %s188 = scalar_lea.vmem %s3, %s187
        %v189 = vld [vmem:[%s162] sm:$0xff]
        %v190 = vld [vmem:[%s1] sm:$0x1]
        %v192 = vperm.slane %v190, 0
        %v194 = vmul.f32 %v189, %v192
        %vm195 = vcmask 261120
        %v196 = vsel %vm195, %v194, 0.0
        %197 = vadd.xlane.f32.xlu0 %v196
        %v198 = vpop.xlane.xlu0 %197
        %s199 = sld [smem:[#allocation2]]
        %v200 = vstv %s199
        %v201 = vadd.f32 %v198, %v200
        %vm202 = vcmask 7168
        %203 = vst.msk [vmem:[%s188] sm:$0xff] %vm202, %v201
        %p204 = scmp.lt.s32.totalorder %s18, 1
        %s205 = scalar_select %p204, %s18, 1
        %s206 = smul.addr %s205, 8
        %s207 = scalar_lea.vmem %s3, %s206
        // Predicated region
        $region37: #{tpu_custom_call.1} parent=31 // pred_check
          %p208 = pneg %p104
        $region38: #{tpu_custom_call.1} parent=31 // pred_check_branch
          %210 = sbr.rel (%p208) target = $region40
        $region39: #{tpu_custom_call.1} parent=31 // pred_region
          _
        $region40: #{tpu_custom_call.1} parent=31 // pred_fallthru
          _
      $region32: #{tpu_custom_call.1} parent=5 // pred_fallthru
        _
      %p211 = scmp.le.s32.totalorder 2, %s13
      // Predicated region
      $region41: #{tpu_custom_call.1} parent=5 // pred_check
        %p212 = pneg %p211
      $region42: #{tpu_custom_call.1} parent=5 // pred_check_branch
        %214 = sbr.rel (%p212) target = $region44
      $region43: #{tpu_custom_call.1} parent=5 // pred_region
        %s215 = ssub.s32 %s13, 2
        // Predicated region
        $region45: #{tpu_custom_call.1} parent=43 // pred_check
          %p216 = pneg %p110
        $region46: #{tpu_custom_call.1} parent=43 // pred_check_branch
          %218 = sbr.rel (%p216) target = $region48
        $region47: #{tpu_custom_call.1} parent=43 // pred_region
          %p219 = scmp.lt.s32.totalorder %s19, 1
          %s220 = scalar_select %p219, %s19, 1
          %s221 = smul.addr %s220, 8
          %s222 = scalar_lea.vmem %s3, %s221
        $region48: #{tpu_custom_call.1} parent=43 // pred_fallthru
          _
      $region44: #{tpu_custom_call.1} parent=5 // pred_fallthru
        _
    $region6: #{tpu_custom_call.1} parent=1 // loop_footer
      %s17 = sadd.s32 1, %s13
    $region7: #{tpu_custom_call.1} parent=1 // loop_footer_branch
      %12 = sbr.rel target = $region3
    $region8: #{tpu_custom_call.1} parent=1 // loop_exit
      _
    %223 = vsyncpa [#allocation4], 1
    %s224 = scalar_lea.sflag [#allocation4], 1
    %225 = vsyncpa %s224, 1

</llo_original>
